<compile_context>
chip_gen: v7x
topology: tpu7x:2x2x1
jax: 0.10.0
libtpu: 0.0.40
codegen_flags: <defaults>
</compile_context>

<pallas_src>
import functools

import jax
import jax.numpy as jnp
from jax.experimental import pallas as pl
from jax.experimental.pallas import tpu as pltpu


def local_cnn_kernel(x_ref, w_ref, b_ref, o_ref, *, compute_dtype):
    # x_ref: (TB, W*Z)   input rows, f32 in HBM; cast to compute dtype in-VMEM
    # w_ref: (W*Z, Z*K)  block-structured conv weight (resident across steps)
    # b_ref: (1, Z*K)    per-zone-tiled bias, f32 (resident across steps)
    # o_ref: (TB, Z*K)   lane-dense output tile
    x = x_ref[...].astype(compute_dtype)       # in-kernel cast: hidden under DMA
    acc = jnp.dot(x, w_ref[...], preferred_element_type=jnp.float32)
    acc = acc + b_ref[...]
    o_ref[...] = jnp.maximum(acc, 0.0).astype(o_ref.dtype)


def _round_up(n, m):
    return ((n + m - 1) // m) * m


def local_cnn_forward(x, conv_w, conv_b, *, window, n_zone,
                      tile_b=2048, use_bf16=True, out_dtype=jnp.float32):
    """Forward pass of Local_CNN.

    x: anything reshapable to (B, window, n_zone) -- same contract as the
       PyTorch module's x.view(-1, 1, window, n_zone).
    conv_w: (K, 1, window, 1) Conv2d weight; conv_b: (K,) bias.
    out_dtype: activation storage dtype. f32 matches PyTorch; jnp.bfloat16
       halves the dominant HBM-store term if the consumer tolerates it.
    Returns a 1-tuple with the (B, n_zone, K) activation.
    """
    K = conv_w.shape[0]
    WZ = window * n_zone
    ZK = n_zone * K

    # AdaptiveMaxPool2d((1, n_zone)) is the identity only because the conv
    # output spatial size is exactly (1, n_zone).
    assert conv_w.shape == (K, 1, window, 1), conv_w.shape
    assert x.size % WZ == 0, (x.shape, window, n_zone)

    x_flat = x.reshape(-1, WZ)          # native contiguous layout, no transpose
    B = x_flat.shape[0]

    compute_dtype = jnp.bfloat16 if use_bf16 else x_flat.dtype

    # Block-structured matmul weight (tiny: W*Z x Z*K), built directly in the
    # compute dtype:
    #   Wbig[w*Z + z', z*K + k] = conv_w[k, 0, w, 0]  if z' == z  else 0
    wk = jnp.transpose(conv_w.reshape(K, window), (1, 0)).astype(compute_dtype)
    eye_z = jnp.eye(n_zone, dtype=compute_dtype)                     # (Z, Z)
    w_big = jnp.einsum("wk,pz->wpzk", wk, eye_z).reshape(WZ, ZK)     # (W*Z, Z*K)
    bias = jnp.tile(conv_b.astype(jnp.float32), n_zone).reshape(1, ZK)

    # Batch tiling: TB rows per grid step (multiple of 16 so bf16/f32 sublane
    # packing is clean).  Ragged last block is handled by Pallas (masked OOB
    # output writes), so no padding / slicing HBM passes are needed.
    TB = min(tile_b, _round_up(B, 16))
    # Prefer >= 2 grid steps so dimension_semantics=("parallel",) can shard the
    # grid across v7x's two TensorCores; only split when each half is still a
    # reasonably large tile.
    if pl.cdiv(B, TB) < 2 and B >= 512:
        TB = _round_up(pl.cdiv(B, 2), 16)
    grid = (pl.cdiv(B, TB),)

    itemsize = lambda dt: jnp.dtype(dt).itemsize
    cost = pl.CostEstimate(
        flops=2 * B * WZ * ZK,
        transcendentals=0,
        bytes_accessed=(B * WZ * itemsize(x_flat.dtype)
                        + WZ * ZK * itemsize(compute_dtype)
                        + ZK * 4
                        + B * ZK * itemsize(out_dtype)),
    )

    out_flat = pl.pallas_call(
        functools.partial(local_cnn_kernel, compute_dtype=compute_dtype),
        out_shape=jax.ShapeDtypeStruct((B, ZK), out_dtype),
        grid_spec=pltpu.PrefetchScalarGridSpec(
            num_scalar_prefetch=0,
            grid=grid,
            in_specs=[
                pl.BlockSpec((TB, WZ), lambda i: (i, 0)),
                pl.BlockSpec((WZ, ZK), lambda i: (0, 0)),   # weight stays resident
                pl.BlockSpec((1, ZK), lambda i: (0, 0)),    # bias stays resident
            ],
            out_specs=pl.BlockSpec((TB, ZK), lambda i: (i, 0)),
        ),
        compiler_params=pltpu.CompilerParams(
            dimension_semantics=("parallel",)),  # shard grid steps across TCs (v7x)
        cost_estimate=cost,
    )(x_flat, w_big, bias)

    # squeeze(2) + transpose(1, 2) are realized by the (B, Z, K) layout of this
    # contiguous (free) reshape.
    # TODO(synk): dropout (p=drop_prob) is treated as inference-mode identity.
    out = out_flat.reshape(B, n_zone, K)
    return (out,)


if __name__ == "__main__":
    window, n_zone, n_kernels = 8, 16, 32
    batch = 2

    key = jax.random.PRNGKey(0)
    kx, kw, kb = jax.random.split(key, 3)

    # Deterministic "parameters" matching Conv2d(1, n_kernels, (window, 1)) shapes.
    conv_w = jax.random.normal(kw, (n_kernels, 1, window, 1), dtype=jnp.float32) * 0.1
    conv_b = jax.random.normal(kb, (n_kernels,), dtype=jnp.float32) * 0.1

    # Example input (B, window, n_zone); the module's .view() handles the reshape.
    x = jax.random.normal(kx, (batch, window, n_zone), dtype=jnp.float32)

    (out,) = local_cnn_forward(x, conv_w, conv_b, window=window, n_zone=n_zone)
    out = jax.block_until_ready(out)
    assert out.shape == (batch, n_zone, n_kernels)

    # Reference: the kernel casts x and the conv weight to bf16 before the MXU
    # (f32 accumulation), so compare against bf16-rounded operands.
    xr = x.astype(jnp.bfloat16).astype(jnp.float32)
    wr = conv_w.reshape(n_kernels, window).astype(jnp.bfloat16).astype(jnp.float32)
    ref = jnp.maximum(jnp.einsum("bwz,kw->bzk", xr, wr) + conv_b, 0.0)
    assert jnp.allclose(out, ref, atol=1e-3, rtol=1e-3), \
        float(jnp.max(jnp.abs(out - ref)))

    # Second check: multi-step grid + ragged last block (B not a tile multiple,
    # and the >=2-grid-steps split path is exercised).
    batch2 = 600
    x2 = jax.random.normal(jax.random.PRNGKey(1), (batch2, window, n_zone),
                           dtype=jnp.float32)
    (out2,) = local_cnn_forward(x2, conv_w, conv_b, window=window, n_zone=n_zone)
    out2 = jax.block_until_ready(out2)
    x2r = x2.astype(jnp.bfloat16).astype(jnp.float32)
    ref2 = jnp.maximum(jnp.einsum("bwz,kw->bzk", x2r, wr) + conv_b, 0.0)
    assert out2.shape == (batch2, n_zone, n_kernels)
    assert jnp.allclose(out2, ref2, atol=1e-3, rtol=1e-3)

    # Third check: bf16-output option stays correct (looser tolerance: bf16 store).
    (out3,) = local_cnn_forward(x2, conv_w, conv_b, window=window, n_zone=n_zone,
                                out_dtype=jnp.bfloat16)
    out3 = jax.block_until_ready(out3)
    assert out3.dtype == jnp.bfloat16
    assert jnp.allclose(out3.astype(jnp.float32), ref2, atol=2e-2, rtol=2e-2)

    print("KERNEL_OK")
</pallas_src>

<mosaic_0001>
module attributes {stable_mosaic.version = 11 : i64} {
  func.func @local_cnn_kernel(%arg0: i32, %arg1: memref<16x128xf32, #tpu.memory_space<vmem>>, %arg2: memref<128x512xbf16, #tpu.memory_space<vmem>>, %arg3: memref<1x512xf32, #tpu.memory_space<vmem>>, %arg4: memref<16x512xf32, #tpu.memory_space<vmem>>) attributes {dimension_semantics = [#tpu.dimension_semantics<parallel>], iteration_bounds = array<i64: 1>, scalar_prefetch = 0 : i64, scratch_operands = 0 : i64, tpu.core_type = #tpu.core_type<tc>, window_params = [{transform_indices = @transform_0, window_bounds = array<i64: 16, 128>}, {pipeline_mode = #tpu.pipeline_mode<synchronous>, transform_indices = @transform_1, window_bounds = array<i64: 128, 512>}, {pipeline_mode = #tpu.pipeline_mode<synchronous>, transform_indices = @transform_2, window_bounds = array<i64: 1, 512>}, {transform_indices = @transform_3, window_bounds = array<i64: 16, 512>}]} {
    %c0 = arith.constant 0 : index
    %c0_0 = arith.constant 0 : index
    %0 = vector.load %arg1[%c0, %c0_0] : memref<16x128xf32, #tpu.memory_space<vmem>>, vector<16x128xf32>
    %1 = arith.truncf %0 : vector<16x128xf32> to vector<16x128xbf16>
    %c0_1 = arith.constant 0 : index
    %c0_2 = arith.constant 0 : index
    %2 = vector.load %arg2[%c0_1, %c0_2] : memref<128x512xbf16, #tpu.memory_space<vmem>>, vector<128x512xbf16>
    %cst = arith.constant dense<0.000000e+00> : vector<16x512xf32>
    %3 = tpu.matmul %1, %2, %cst {dimension_numbers = #tpu.dot_dimension_numbers<[1], [0], [0], [1], [0, 0, 1, 1], [], []>} : vector<16x128xbf16>, vector<128x512xbf16>, vector<16x512xf32> -> vector<16x512xf32>
    %c0_3 = arith.constant 0 : index
    %c0_4 = arith.constant 0 : index
    %4 = vector.load %arg3[%c0_3, %c0_4] : memref<1x512xf32, #tpu.memory_space<vmem>>, vector<1x512xf32>
    %5 = vector.broadcast %4 : vector<1x512xf32> to vector<16x512xf32>
    %6 = arith.addf %3, %5 : vector<16x512xf32>
    %cst_5 = arith.constant 0.000000e+00 : f32
    %7 = vector.broadcast %cst_5 : f32 to vector<16x512xf32>
    %8 = arith.maximumf %6, %7 : vector<16x512xf32>
    %c0_6 = arith.constant 0 : index
    %c0_7 = arith.constant 0 : index
    %9 = vector.load %arg4[%c0_6, %c0_7] : memref<16x512xf32, #tpu.memory_space<vmem>>, vector<16x512xf32>
    tpu.vector_store %arg4[%c0_6, %c0_7], %8 {strides = array<i32>} : memref<16x512xf32, #tpu.memory_space<vmem>>, vector<16x512xf32>,
    return
  }
  func.func @transform_0(%arg0: i32) -> (i32, i32) {
    %c0_i32 = arith.constant 0 : i32
    %c0_i32_0 = arith.constant 0 : i32
    return %arg0, %c0_i32 : i32, i32
  }
  func.func @transform_1(%arg0: i32) -> (i32, i32) {
    %c0_i32 = arith.constant 0 : i32
    %c0_i32_0 = arith.constant 0 : i32
    %c0_i32_1 = arith.constant 0 : i32
    return %c0_i32, %c0_i32_0 : i32, i32
  }
  func.func @transform_2(%arg0: i32) -> (i32, i32) {
    %c0_i32 = arith.constant 0 : i32
    %c0_i32_0 = arith.constant 0 : i32
    %c0_i32_1 = arith.constant 0 : i32
    return %c0_i32, %c0_i32_0 : i32, i32
  }
  func.func @transform_3(%arg0: i32) -> (i32, i32) {
    %c0_i32 = arith.constant 0 : i32
    %c0_i32_0 = arith.constant 0 : i32
    return %arg0, %c0_i32 : i32, i32
  }
}

</mosaic_0001>

<llo_original>
// kernel: tpu_custom_call.1
$region0: #{tpu_custom_call.1}
  #allocation0 [shape = 'u32[]', space=smem, size = 0x4, offset = 0x4, fixed_abs, tag = 'smem constant byte address 0x4 - core index']
  #allocation1 [shape = 'u32[144,128]{1,0:T(1,128)}', space=vmem, size = 0x12000, scoped, tag = 'internal scratch']
  %s0 = inlined_call_operand.hbm [shape: f32[2,128], index: 0, kind: input, shape index: {}]
  %s1 = inlined_call_operand.hbm [shape: bf16[128,512], index: 1, kind: input, shape index: {}]
  %s2 = inlined_call_operand.vmem [shape: f32[1,512], index: 2, kind: input, shape index: {}]
  %s3 = inlined_call_operand.hbm [shape: f32[2,512], index: 3, kind: output, shape index: {}]
  %s4 = sld [smem:[#allocation0]]
  $region30: #{tpu_custom_call.1} parent=0
    _
  %s6 = ssub.s32 1, %s4
  %s7 = scalar_select 0, %s6, %s4
  $region1: #{tpu_custom_call.1} parent=0
    #allocation2 [shape = 'u8[8192]{0}', space=vmem, size = 0x2000, scoped, tag = 'input window, operand 0, single buffered']
    #allocation3 [shape = 's32[1]{0}', space=sflag, size = 0x4, scoped, tag = 'scoped memory for tpu_custom_call.1']
    #allocation4 [shape = 's32[1]{0}', space=sflag, size = 0x4, scoped, tag = 'scoped memory for tpu_custom_call.1']
    #allocation5 [shape = 'u8[131072]{0}', space=vmem, size = 0x20000, scoped, tag = 'input window, operand 1, single buffered']
    #allocation6 [shape = 's32[1]{0}', space=sflag, size = 0x4, scoped, tag = 'scoped memory for tpu_custom_call.1']
    #allocation7 [shape = 'u8[32768]{0}', space=vmem, size = 0x8000, scoped, tag = 'output window, operand 0, single buffered']
    %8 = vsyncpa [#allocation3], 0
    %9 = vsyncpa [#allocation6], 0
    %10 = vsyncpa [#allocation4], 0
    // Predicated region
    $region2: #{tpu_custom_call.1} parent=1 // pred_check
      _
    $region3: #{tpu_custom_call.1} parent=1 // pred_check_branch
      %12 = sbr.rel (0) target = $region5
    $region4: #{tpu_custom_call.1} parent=1 // pred_region
      %s14 = ssub.s32 256, 32
      %15 = vsyncadd [#allocation3], %s14
      %s16 = sshll.u32 [#allocation2], 4
      %s17 = int_to_ptr.vmem [resolvable:$true] %s16
      %22 = dma.hbm_to_vmem [thread:$0]  %s0, 32, %s17, [#allocation3], 32, 32, 2
    $region5: #{tpu_custom_call.1} parent=1 // pred_fallthru
      _
    // Predicated region
    $region6: #{tpu_custom_call.1} parent=1 // pred_check
      _
    $region7: #{tpu_custom_call.1} parent=1 // pred_check_branch
      %24 = sbr.rel (0) target = $region9
    $region8: #{tpu_custom_call.1} parent=1 // pred_region
      %s26 = ssub.s32 4096, 4096
      %27 = vsyncadd [#allocation6], %s26
      %s28 = sshll.u32 [#allocation5], 4
      %s29 = int_to_ptr.vmem [resolvable:$true] %s28
      %34 = dma.hbm_to_vmem [thread:$0]  %s1, 4096, %s29, [#allocation6], 256, 256, 16
    $region9: #{tpu_custom_call.1} parent=1 // pred_fallthru
      _
    // Predicated region
    $region10: #{tpu_custom_call.1} parent=1 // pred_check
      _
    $region11: #{tpu_custom_call.1} parent=1 // pred_check_branch
      %36 = sbr.rel (0) target = $region13
    $region12: #{tpu_custom_call.1} parent=1 // pred_region
      _
    $region13: #{tpu_custom_call.1} parent=1 // pred_fallthru
      _
    // Predicated region
    $region14: #{tpu_custom_call.1} parent=1 // pred_check
      _
    $region15: #{tpu_custom_call.1} parent=1 // pred_check_branch
      %38 = sbr.rel (0) target = $region17
    $region16: #{tpu_custom_call.1} parent=1 // pred_region
      %39 = dma.done [#allocation3], 256
    $region17: #{tpu_custom_call.1} parent=1 // pred_fallthru
      _
    // Predicated region
    $region18: #{tpu_custom_call.1} parent=1 // pred_check
      _
    $region19: #{tpu_custom_call.1} parent=1 // pred_check_branch
      %41 = sbr.rel (0) target = $region21
    $region20: #{tpu_custom_call.1} parent=1 // pred_region
      %42 = dma.done [#allocation6], 4096
    $region21: #{tpu_custom_call.1} parent=1 // pred_fallthru
      _
    %v44 = vld [vmem:[#allocation2] sm:$0xff]
    %v45 = vld [vmem:[#allocation2 + $0x8] sm:$0xff]
    %v46 = vpack.c.bf16 %v45, %v44
    %v47 = vld [vmem:[#allocation5] sm:$0xff]
    %v48 = vld [vmem:[#allocation5 + $0x8] sm:$0xff]
    %v49 = vld [vmem:[#allocation5 + $0x10] sm:$0xff]
    %v50 = vld [vmem:[#allocation5 + $0x18] sm:$0xff]
    %v51 = vld [vmem:[#allocation5 + $0x20] sm:$0xff]
    %v52 = vld [vmem:[#allocation5 + $0x28] sm:$0xff]
    %v53 = vld [vmem:[#allocation5 + $0x30] sm:$0xff]
    %v54 = vld [vmem:[#allocation5 + $0x38] sm:$0xff]
    %v55 = vld [vmem:[#allocation5 + $0x40] sm:$0xff]
    %v56 = vld [vmem:[#allocation5 + $0x48] sm:$0xff]
    %v57 = vld [vmem:[#allocation5 + $0x50] sm:$0xff]
    %v58 = vld [vmem:[#allocation5 + $0x58] sm:$0xff]
    %v59 = vld [vmem:[#allocation5 + $0x60] sm:$0xff]
    %v60 = vld [vmem:[#allocation5 + $0x68] sm:$0xff]
    %v61 = vld [vmem:[#allocation5 + $0x70] sm:$0xff]
    %v62 = vld [vmem:[#allocation5 + $0x78] sm:$0xff]
    %v63 = vld [vmem:[#allocation5 + $0x80] sm:$0xff]
    %v64 = vld [vmem:[#allocation5 + $0x88] sm:$0xff]
    %v65 = vld [vmem:[#allocation5 + $0x90] sm:$0xff]
    %v66 = vld [vmem:[#allocation5 + $0x98] sm:$0xff]
    %v67 = vld [vmem:[#allocation5 + $0xa0] sm:$0xff]
    %v68 = vld [vmem:[#allocation5 + $0xa8] sm:$0xff]
    %v69 = vld [vmem:[#allocation5 + $0xb0] sm:$0xff]
    %v70 = vld [vmem:[#allocation5 + $0xb8] sm:$0xff]
    %v71 = vld [vmem:[#allocation5 + $0xc0] sm:$0xff]
    %v72 = vld [vmem:[#allocation5 + $0xc8] sm:$0xff]
    %v73 = vld [vmem:[#allocation5 + $0xd0] sm:$0xff]
    %v74 = vld [vmem:[#allocation5 + $0xd8] sm:$0xff]
    %v75 = vld [vmem:[#allocation5 + $0xe0] sm:$0xff]
    %v76 = vld [vmem:[#allocation5 + $0xe8] sm:$0xff]
    %v77 = vld [vmem:[#allocation5 + $0xf0] sm:$0xff]
    %v78 = vld [vmem:[#allocation5 + $0xf8] sm:$0xff]
    %v79 = vld [vmem:[%s2] sm:$0xf]
    %v81 = vlaneseq
    %v82 = vshrl.u32 %v81, 7
    %v83 = vsub.s32 0, %v82
    %v84 = vrot.slane %v79, %v83
    %v85 = vlaneseq
    %v86 = vshrl.u32 %v85, 7
    %v87 = vsub.s32 1, %v86
    %v88 = vrot.slane %v79, %v87
    %v89 = vlaneseq
    %v90 = vshrl.u32 %v89, 7
    %v91 = vsub.s32 2, %v90
    %v92 = vrot.slane %v79, %v91
    %v93 = vlaneseq
    %v94 = vshrl.u32 %v93, 7
    %v95 = vsub.s32 3, %v94
    %v96 = vrot.slane %v79, %v95
    %v133 = vunpack.c.l.b16 %v47
    %v134 = vunpack.c.h.b16 %v47
    %v135 = vunpack.c.l.b16 %v48
    %v136 = vunpack.c.h.b16 %v48
    %v137 = vunpack.c.l.b16 %v49
    %v138 = vunpack.c.h.b16 %v49
    %v139 = vunpack.c.l.b16 %v50
    %v140 = vunpack.c.h.b16 %v50
    %v141 = vunpack.c.l.b16 %v51
    %v142 = vunpack.c.h.b16 %v51
    %v143 = vunpack.c.l.b16 %v52
    %v144 = vunpack.c.h.b16 %v52
    %v145 = vunpack.c.l.b16 %v53
    %v146 = vunpack.c.h.b16 %v53
    %v147 = vunpack.c.l.b16 %v54
    %v148 = vunpack.c.h.b16 %v54
    %v149 = vunpack.c.l.b16 %v55
    %v150 = vunpack.c.h.b16 %v55
    %v151 = vunpack.c.l.b16 %v56
    %v152 = vunpack.c.h.b16 %v56
    %v153 = vunpack.c.l.b16 %v57
    %v154 = vunpack.c.h.b16 %v57
    %v155 = vunpack.c.l.b16 %v58
    %v156 = vunpack.c.h.b16 %v58
    %v157 = vunpack.c.l.b16 %v59
    %v158 = vunpack.c.h.b16 %v59
    %v159 = vunpack.c.l.b16 %v60
    %v160 = vunpack.c.h.b16 %v60
    %v161 = vunpack.c.l.b16 %v61
    %v162 = vunpack.c.h.b16 %v61
    %v163 = vunpack.c.l.b16 %v62
    %v164 = vunpack.c.h.b16 %v62
    %v165 = vunpack.c.l.b16 %v63
    %v166 = vunpack.c.h.b16 %v63
    %v167 = vunpack.c.l.b16 %v64
    %v168 = vunpack.c.h.b16 %v64
    %v169 = vunpack.c.l.b16 %v65
    %v170 = vunpack.c.h.b16 %v65
    %v171 = vunpack.c.l.b16 %v66
    %v172 = vunpack.c.h.b16 %v66
    %v173 = vunpack.c.l.b16 %v67
    %v174 = vunpack.c.h.b16 %v67
    %v175 = vunpack.c.l.b16 %v68
    %v176 = vunpack.c.h.b16 %v68
    %v177 = vunpack.c.l.b16 %v69
    %v178 = vunpack.c.h.b16 %v69
    %v179 = vunpack.c.l.b16 %v70
    %v180 = vunpack.c.h.b16 %v70
    %v181 = vunpack.c.l.b16 %v71
    %v182 = vunpack.c.h.b16 %v71
    %v183 = vunpack.c.l.b16 %v72
    %v184 = vunpack.c.h.b16 %v72
    %v185 = vunpack.c.l.b16 %v73
    %v186 = vunpack.c.h.b16 %v73
    %v187 = vunpack.c.l.b16 %v74
    %v188 = vunpack.c.h.b16 %v74
    %v189 = vunpack.c.l.b16 %v75
    %v190 = vunpack.c.h.b16 %v75
    %v191 = vunpack.c.l.b16 %v76
    %v192 = vunpack.c.h.b16 %v76
    %v193 = vunpack.c.l.b16 %v77
    %v194 = vunpack.c.h.b16 %v77
    %v195 = vunpack.c.l.b16 %v78
    %v196 = vunpack.c.h.b16 %v78
    %v197 = vpack.c.b16 %v137, %v133
    %v198 = vpack.c.b16 %v138, %v134
    %v199 = vpack.c.b16 %v139, %v135
    %v200 = vpack.c.b16 %v140, %v136
    %v201 = vpack.c.b16 %v145, %v141
    %v202 = vpack.c.b16 %v146, %v142
    %v203 = vpack.c.b16 %v147, %v143
    %v204 = vpack.c.b16 %v148, %v144
    %v205 = vpack.c.b16 %v153, %v149
    %v206 = vpack.c.b16 %v154, %v150
    %v207 = vpack.c.b16 %v155, %v151
    %v208 = vpack.c.b16 %v156, %v152
    %v209 = vpack.c.b16 %v161, %v157
    %v210 = vpack.c.b16 %v162, %v158
    %v211 = vpack.c.b16 %v163, %v159
    %v212 = vpack.c.b16 %v164, %v160
    %v213 = vpack.c.b16 %v169, %v165
    %v214 = vpack.c.b16 %v170, %v166
    %v215 = vpack.c.b16 %v171, %v167
    %v216 = vpack.c.b16 %v172, %v168
    %v217 = vpack.c.b16 %v177, %v173
    %v218 = vpack.c.b16 %v178, %v174
    %v219 = vpack.c.b16 %v179, %v175
    %v220 = vpack.c.b16 %v180, %v176
    %v221 = vpack.c.b16 %v185, %v181
    %v222 = vpack.c.b16 %v186, %v182
    %v223 = vpack.c.b16 %v187, %v183
    %v224 = vpack.c.b16 %v188, %v184
    %v225 = vpack.c.b16 %v193, %v189
    %v226 = vpack.c.b16 %v194, %v190
    %v227 = vpack.c.b16 %v195, %v191
    %v228 = vpack.c.b16 %v196, %v192
    %261 = vmatprep.subr.bf16.mxu0 %v198
    %262 = vmatpush1.bf16.msra.mxu0 %v197
    %263 = vmatprep.subr.bf16.mxu0 %v202
    %264 = vmatpush1.bf16.msra.mxu0 %v201
    %265 = vmatprep.subr.bf16.mxu0 %v206
    %266 = vmatpush1.bf16.msra.mxu0 %v205
    %267 = vmatprep.subr.bf16.mxu0 %v210
    %268 = vmatpush1.bf16.msra.mxu0 %v209
    %269 = vmatprep.subr.bf16.mxu0 %v214
    %270 = vmatpush1.bf16.msra.mxu0 %v213
    %271 = vmatprep.subr.bf16.mxu0 %v218
    %272 = vmatpush1.bf16.msra.mxu0 %v217
    %273 = vmatprep.subr.bf16.mxu0 %v222
    %274 = vmatpush1.bf16.msra.mxu0 %v221
    %275 = vmatprep.subr.bf16.mxu0 %v226
    %276 = vmatpush1.bf16.msra.mxu0 %v225
    %277 = vmatprep.subr.bf16.mxu0 0
    %278 = vmatpush1.bf16.msra.mxu0 0
    %279 = vmatprep.subr.bf16.mxu0 0
    %280 = vmatpush1.bf16.msra.mxu0 0
    %281 = vmatprep.subr.bf16.mxu0 0
    %282 = vmatpush1.bf16.msra.mxu0 0
    %283 = vmatprep.subr.bf16.mxu0 0
    %284 = vmatpush1.bf16.msra.mxu0 0
    %285 = vmatprep.subr.bf16.mxu0 0
    %286 = vmatpush1.bf16.msra.mxu0 0
    %287 = vmatprep.subr.bf16.mxu0 0
    %288 = vmatpush1.bf16.msra.mxu0 0
    %289 = vmatprep.subr.bf16.mxu0 0
    %290 = vmatpush1.bf16.msra.mxu0 0
    %291 = vmatprep.subr.bf16.mxu0 0
    %292 = vmatpush1.bf16.msra.mxu0 0
    %293 = vmatprep.mubr.bf16.mxu0 0
    %294 = vmatmul.mubr.bf16.gmra.mrb[0].mxu0 %v46
    %v295 = vpop.f32.mrb[0].mxu0
    %v296 = vadd.f32 %v84, %v295
    %v297 = vpop.f32.mrb[0].mxu0
    %v298 = vadd.f32 %v88, %v297
    %v299 = vpop.f32.mrb[0].mxu0
    %v300 = vadd.f32 %v84, %v299
    %v301 = vpop.f32.mrb[0].mxu0
    %v302 = vadd.f32 %v88, %v301
    %303 = vdwg.mxu0
    %304 = vmatprep.subr.bf16.mxu0 %v200
    %305 = vmatpush1.bf16.msra.mxu0 %v199
    %306 = vmatprep.subr.bf16.mxu0 %v204
    %307 = vmatpush1.bf16.msra.mxu0 %v203
    %308 = vmatprep.subr.bf16.mxu0 %v208
    %309 = vmatpush1.bf16.msra.mxu0 %v207
    %310 = vmatprep.subr.bf16.mxu0 %v212
    %311 = vmatpush1.bf16.msra.mxu0 %v211
    %312 = vmatprep.subr.bf16.mxu0 %v216
    %313 = vmatpush1.bf16.msra.mxu0 %v215
    %314 = vmatprep.subr.bf16.mxu0 %v220
    %315 = vmatpush1.bf16.msra.mxu0 %v219
    %316 = vmatprep.subr.bf16.mxu0 %v224
    %317 = vmatpush1.bf16.msra.mxu0 %v223
    %318 = vmatprep.subr.bf16.mxu0 %v228
    %319 = vmatpush1.bf16.msra.mxu0 %v227
    %320 = vmatprep.subr.bf16.mxu0 0
    %321 = vmatpush1.bf16.msra.mxu0 0
    %322 = vmatprep.subr.bf16.mxu0 0
    %323 = vmatpush1.bf16.msra.mxu0 0
    %324 = vmatprep.subr.bf16.mxu0 0
    %325 = vmatpush1.bf16.msra.mxu0 0
    %326 = vmatprep.subr.bf16.mxu0 0
    %327 = vmatpush1.bf16.msra.mxu0 0
    %328 = vmatprep.subr.bf16.mxu0 0
    %329 = vmatpush1.bf16.msra.mxu0 0
    %330 = vmatprep.subr.bf16.mxu0 0
    %331 = vmatpush1.bf16.msra.mxu0 0
    %332 = vmatprep.subr.bf16.mxu0 0
    %333 = vmatpush1.bf16.msra.mxu0 0
    %334 = vmatprep.subr.bf16.mxu0 0
    %335 = vmatpush1.bf16.msra.mxu0 0
    %336 = vmatprep.mubr.bf16.mxu0 0
    %337 = vmatmul.mubr.bf16.gmra.mrb[0].mxu0 %v46
    %v338 = vpop.f32.mrb[0].mxu0
    %v339 = vadd.f32 %v92, %v338
    %v340 = vpop.f32.mrb[0].mxu0
    %v341 = vadd.f32 %v96, %v340
    %v342 = vpop.f32.mrb[0].mxu0
    %v343 = vadd.f32 %v92, %v342
    %v344 = vpop.f32.mrb[0].mxu0
    %v345 = vadd.f32 %v96, %v344
    %346 = vdwg.mxu0
    %v347 = vmax.f32 %v296, 0.0
    %v348 = vmax.f32 %v298, 0.0
    %v349 = vmax.f32 %v339, 0.0
    %v350 = vmax.f32 %v341, 0.0
    %v351 = vmax.f32 %v300, 0.0
    %v352 = vmax.f32 %v302, 0.0
    %v353 = vmax.f32 %v343, 0.0
    %v354 = vmax.f32 %v345, 0.0
    %v363 = vcombine.low %v347, %v348
    %v364 = vcombine.high %v347, %v348
    %v365 = vcombine.low %v349, %v350
    %v366 = vcombine.high %v349, %v350
    %v368 = vunpack.c.l.s4 1983009808
    %v369 = vunpack.c.0.s8 %v368
    %v370 = vlaneseq
    %v371 = vshrl.u32 %v370, 7
    %v372 = vsub.s32 %v369, %v371
    %v373 = vrot.slane %v363, %v372
    %v375 = vunpack.c.l.s4 1983009808
    %v376 = vunpack.c.0.s8 %v375
    %v377 = vlaneseq
    %v378 = vshrl.u32 %v377, 7
    %v379 = vsub.s32 %v376, %v378
    %v380 = vrot.slane %v364, %v379
    %v382 = vunpack.c.l.s4 1983009808
    %v383 = vunpack.c.0.s8 %v382
    %v384 = vlaneseq
    %v385 = vshrl.u32 %v384, 7
    %v386 = vsub.s32 %v383, %v385
    %v387 = vrot.slane %v365, %v386
    %v389 = vunpack.c.l.s4 1983009808
    %v390 = vunpack.c.0.s8 %v389
    %v391 = vlaneseq
    %v392 = vshrl.u32 %v391, 7
    %v393 = vsub.s32 %v390, %v392
    %v394 = vrot.slane %v366, %v393
    %v395 = vcombine.low %v373, %v387
    %v396 = vcombine.high %v373, %v387
    %v397 = vcombine.low %v380, %v394
    %v398 = vcombine.high %v380, %v394
    %v399 = vcombine.low %v351, %v352
    %v400 = vcombine.high %v351, %v352
    %v401 = vcombine.low %v353, %v354
    %v402 = vcombine.high %v353, %v354
    %v404 = vunpack.c.l.s4 1983009808
    %v405 = vunpack.c.0.s8 %v404
    %v406 = vlaneseq
    %v407 = vshrl.u32 %v406, 7
    %v408 = vsub.s32 %v405, %v407
    %v409 = vrot.slane %v399, %v408
    %v411 = vunpack.c.l.s4 1983009808
    %v412 = vunpack.c.0.s8 %v411
    %v413 = vlaneseq
    %v414 = vshrl.u32 %v413, 7
    %v415 = vsub.s32 %v412, %v414
    %v416 = vrot.slane %v400, %v415
    %v418 = vunpack.c.l.s4 1983009808
    %v419 = vunpack.c.0.s8 %v418
    %v420 = vlaneseq
    %v421 = vshrl.u32 %v420, 7
    %v422 = vsub.s32 %v419, %v421
    %v423 = vrot.slane %v401, %v422
    %v425 = vunpack.c.l.s4 1983009808
    %v426 = vunpack.c.0.s8 %v425
    %v427 = vlaneseq
    %v428 = vshrl.u32 %v427, 7
    %v429 = vsub.s32 %v426, %v428
    %v430 = vrot.slane %v402, %v429
    %v431 = vcombine.low %v409, %v423
    %v432 = vcombine.high %v409, %v423
    %v433 = vcombine.low %v416, %v430
    %v434 = vcombine.high %v416, %v430
    %443 = vst [vmem:[#allocation7] sm:$0xff] %v395
    %444 = vst [vmem:[#allocation7 + $0x8] sm:$0xff] %v396
    %445 = vst [vmem:[#allocation7 + $0x10] sm:$0xff] %v397
    %446 = vst [vmem:[#allocation7 + $0x18] sm:$0xff] %v398
    %447 = vst [vmem:[#allocation7 + $0x20] sm:$0xff] %v431
    %448 = vst [vmem:[#allocation7 + $0x28] sm:$0xff] %v432
    %449 = vst [vmem:[#allocation7 + $0x30] sm:$0xff] %v433
    %450 = vst [vmem:[#allocation7 + $0x38] sm:$0xff] %v434
    // Predicated region
    $region22: #{tpu_custom_call.1} parent=1 // pred_check
      _
    $region23: #{tpu_custom_call.1} parent=1 // pred_check_branch
      %452 = sbr.rel (0) target = $region25
    $region24: #{tpu_custom_call.1} parent=1 // pred_region
      %s454 = ssub.s32 1024, 128
      %455 = vsyncadd [#allocation4], %s454
      %s456 = sshll.u32 [#allocation7], 4
      %s457 = int_to_ptr.vmem [resolvable:$true] %s456
      %462 = dma.vmem_to_hbm [thread:$0]  %s457, 128, %s3, [#allocation4], 128, 128, 8
    $region25: #{tpu_custom_call.1} parent=1 // pred_fallthru
      _
    // Predicated region
    $region26: #{tpu_custom_call.1} parent=1 // pred_check
      _
    $region27: #{tpu_custom_call.1} parent=1 // pred_check_branch
      %464 = sbr.rel (0) target = $region29
    $region28: #{tpu_custom_call.1} parent=1 // pred_region
      %465 = dma.done [#allocation4], 1024
    $region29: #{tpu_custom_call.1} parent=1 // pred_fallthru
      _
    %466 = vsyncpa [#allocation3], 1
    %467 = vsyncpa [#allocation6], 1
    %468 = vsyncpa [#allocation4], 1

</llo_original>
